<compile_context>
chip_gen: v7x
topology: tpu7x:2x2x1
jax: 0.10.0
libtpu: 0.0.40
codegen_flags: <defaults>
</compile_context>

<pallas_src>
import math

import jax
import jax.numpy as jnp
from jax.experimental import pallas as pl
from jax.experimental.pallas import tpu as pltpu


def rmsnorm_kernel(x_ref, gamma_ref, o_ref, *, eps, inv_dim):
    # Pass 1: sum of squares in f32 (short-lived temporary).
    xf = x_ref[...].astype(jnp.float32)                       # (tile_rows, dim)
    ms = jnp.sum(xf * xf, axis=-1, keepdims=True) * inv_dim   # mean over last axis
    inv = jax.lax.rsqrt(ms + eps)                              # EUP slot
    # Pass 2: re-read x and fuse the upcast into the final scale so the full
    # f32 tile from pass 1 does not need to stay live across the rsqrt.
    g = gamma_ref[...]                                         # (1, dim), f32
    o_ref[...] = (x_ref[...].astype(jnp.float32) * inv * g).astype(o_ref.dtype)


def _vmem_capacity_bytes():
    # Trace-time hardware query; fall back to the most conservative (v7x-like)
    # per-core capacity if the query is unavailable.
    try:
        return int(pltpu.get_tpu_info().vmem_capacity_bytes)
    except Exception:
        return 64 * 1024 * 1024


def _budgets(vmem_capacity):
    # Returns (tile_budget_bytes, vmem_limit_cap_bytes).
    if vmem_capacity <= 64 * 1024 * 1024:
        # v7x-class: 64 MiB physical VMEM per TC. Keep double-buffered tiles
        # + f32 temps + compiler scratch comfortably under ~48 MiB scoped.
        return 36 << 20, 48 << 20
    # v5e/v6e-class: 128 MiB physical VMEM. Bigger tiles amortize the ~0.35us
    # per-step overhead for small dims; cap scoped VMEM at ~96 MiB.
    return 80 << 20, 96 << 20


def _sublane_rows(itemsize):
    # Sub-32-bit dtypes pack along sublanes: f32 -> 8, bf16 -> 16, int8/fp8 -> 32.
    return max(8, 32 // max(int(itemsize), 1))


def _choose_tile_rows(rows, dim, itemsize, tile_budget, sublane):
    # Per-row VMEM cost:
    #   2x input  (double-buffered)  : 2 * dim * itemsize
    #   2x output (double-buffered)  : 2 * dim * itemsize
    #   ~2x f32 upcast temporaries   : 2 * dim * 4
    bytes_per_row = dim * (4 * itemsize + 8)
    tile_rows = tile_budget // max(bytes_per_row, 1)
    tile_rows = max(sublane, (int(tile_rows) // sublane) * sublane)
    # Never larger than the (sublane-rounded) total row count.
    rows_rounded = ((rows + sublane - 1) // sublane) * sublane
    return max(min(tile_rows, rows_rounded), sublane)


def rms_norm(x, gamma, eps=1e-6, tile_rows=None):
    """x: (..., dim), gamma: (dim,). Returns same shape/dtype as x."""
    orig_shape = x.shape
    dim = orig_shape[-1]
    rows = math.prod(orig_shape[:-1]) if len(orig_shape) > 1 else 1
    x2 = x.reshape(rows, dim)
    # Cast gamma to f32 once in the wrapper; constant index_map means it is
    # DMA'd as one small tile, not re-cast every grid step.
    g2 = gamma.astype(jnp.float32).reshape(1, dim)

    itemsize = x2.dtype.itemsize
    sublane = _sublane_rows(itemsize)
    vmem_capacity = _vmem_capacity_bytes()
    tile_budget, vmem_cap = _budgets(vmem_capacity)

    if tile_rows is None:
        tile_rows = _choose_tile_rows(rows, dim, itemsize, tile_budget, sublane)
        # Megacore balance (2 TensorCores on v7x-class chips): ensure the 1-D
        # "parallel" grid has at least ~4 steps when the workload is big enough,
        # so work can be split evenly. No-op on single-TC v5e/v6e and for tiny
        # problems that fit in one tile anyway.
        if vmem_capacity <= 64 * 1024 * 1024:
            min_steps = 4
            if rows >= min_steps * sublane:
                bal = -(-rows // min_steps)  # cdiv(rows, min_steps)
                bal = ((bal + sublane - 1) // sublane) * sublane
                tile_rows = min(tile_rows, bal)
        tile_rows = max((tile_rows // sublane) * sublane, sublane)

    grid = (pl.cdiv(rows, tile_rows),)  # ragged last block handled by Pallas
    # (Row-axis padding in the ragged block never touches the reduction axis,
    #  so results are unaffected.)

    # Scoped VMEM: double-buffered in/out tiles + f32 temporaries + gamma,
    # plus headroom for compiler-internal scratch; capped per generation.
    needed = tile_rows * dim * (4 * itemsize + 8) + 2 * dim * 4
    vmem_limit = int(min(max(needed + (8 << 20), 32 << 20), vmem_cap))

    out = pl.pallas_call(
        lambda x_ref, g_ref, o_ref: rmsnorm_kernel(
            x_ref, g_ref, o_ref, eps=eps, inv_dim=1.0 / dim
        ),
        out_shape=jax.ShapeDtypeStruct((rows, dim), x.dtype),
        grid_spec=pltpu.PrefetchScalarGridSpec(
            num_scalar_prefetch=0,
            grid=grid,
            in_specs=[
                pl.BlockSpec((tile_rows, dim), lambda i: (i, 0)),
                pl.BlockSpec((1, dim), lambda i: (0, 0)),
            ],
            out_specs=pl.BlockSpec((tile_rows, dim), lambda i: (i, 0)),
        ),
        compiler_params=pltpu.CompilerParams(
            dimension_semantics=("parallel",),
            vmem_limit_bytes=vmem_limit,
        ),
    )(x2, g2)

    return out.reshape(orig_shape)


if __name__ == "__main__":
    key = jax.random.PRNGKey(0)
    batch, seq, dim = 2, 8, 32
    x = jax.random.normal(key, (batch, seq, dim), dtype=jnp.float32)
    gamma = jnp.ones((dim,), dtype=jnp.float32)  # matches nn.Parameter(torch.ones(dim))

    y = rms_norm(x, gamma, eps=1e-6)
    y = jax.block_until_ready(y)

    # Reference check in plain JAX (same semantics as the torch module:
    # x * rsqrt(mean(x^2, -1) + eps) * gamma).
    ref = x * jax.lax.rsqrt(jnp.mean(x * x, axis=-1, keepdims=True) + 1e-6) * gamma
    assert jnp.allclose(y, ref, atol=1e-5, rtol=1e-5)

    print("KERNEL_OK")
</pallas_src>

<mosaic_0001>
module attributes {stable_mosaic.version = 11 : i64} {
  func.func @_lambda_(%arg0: i32, %arg1: memref<16x32xf32, #tpu.memory_space<vmem>>, %arg2: memref<1x32xf32, #tpu.memory_space<vmem>>, %arg3: memref<16x32xf32, #tpu.memory_space<vmem>>) attributes {dimension_semantics = [#tpu.dimension_semantics<parallel>], iteration_bounds = array<i64: 1>, scalar_prefetch = 0 : i64, scratch_operands = 0 : i64, tpu.core_type = #tpu.core_type<tc>, window_params = [{transform_indices = @transform_0, window_bounds = array<i64: 16, 32>}, {pipeline_mode = #tpu.pipeline_mode<synchronous>, transform_indices = @transform_1, window_bounds = array<i64: 1, 32>}, {transform_indices = @transform_2, window_bounds = array<i64: 16, 32>}]} {
    %c0 = arith.constant 0 : index
    %c0_0 = arith.constant 0 : index
    %0 = vector.load %arg1[%c0, %c0_0] : memref<16x32xf32, #tpu.memory_space<vmem>>, vector<16x32xf32>
    %1 = arith.mulf %0, %0 : vector<16x32xf32>
    %cst = arith.constant dense<0.000000e+00> : vector<16xf32>
    %2 = vector.multi_reduction <add>, %1, %cst [1] : vector<16x32xf32> to vector<16xf32>
    %3 = vector.shape_cast %2 : vector<16xf32> to vector<16x1xf32>
    %cst_1 = arith.constant 3.125000e-02 : f32
    %4 = vector.broadcast %cst_1 : f32 to vector<16x1xf32>
    %5 = arith.mulf %3, %4 : vector<16x1xf32>
    %cst_2 = arith.constant 9.99999997E-7 : f32
    %6 = vector.broadcast %cst_2 : f32 to vector<16x1xf32>
    %7 = arith.addf %5, %6 : vector<16x1xf32>
    %8 = math.rsqrt %7 : vector<16x1xf32>
    %c0_3 = arith.constant 0 : index
    %c0_4 = arith.constant 0 : index
    %9 = vector.load %arg2[%c0_3, %c0_4] : memref<1x32xf32, #tpu.memory_space<vmem>>, vector<1x32xf32>
    %c0_5 = arith.constant 0 : index
    %c0_6 = arith.constant 0 : index
    %10 = vector.load %arg1[%c0_5, %c0_6] : memref<16x32xf32, #tpu.memory_space<vmem>>, vector<16x32xf32>
    %11 = vector.broadcast %8 : vector<16x1xf32> to vector<16x32xf32>
    %12 = arith.mulf %10, %11 : vector<16x32xf32>
    %13 = vector.broadcast %9 : vector<1x32xf32> to vector<16x32xf32>
    %14 = arith.mulf %12, %13 : vector<16x32xf32>
    %c0_7 = arith.constant 0 : index
    %c0_8 = arith.constant 0 : index
    %15 = vector.load %arg3[%c0_7, %c0_8] : memref<16x32xf32, #tpu.memory_space<vmem>>, vector<16x32xf32>
    tpu.vector_store %arg3[%c0_7, %c0_8], %14 {strides = array<i32>} : memref<16x32xf32, #tpu.memory_space<vmem>>, vector<16x32xf32>,
    return
  }
  func.func @transform_0(%arg0: i32) -> (i32, i32) {
    %c0_i32 = arith.constant 0 : i32
    %c0_i32_0 = arith.constant 0 : i32
    return %arg0, %c0_i32 : i32, i32
  }
  func.func @transform_1(%arg0: i32) -> (i32, i32) {
    %c0_i32 = arith.constant 0 : i32
    %c0_i32_0 = arith.constant 0 : i32
    %c0_i32_1 = arith.constant 0 : i32
    return %c0_i32, %c0_i32_0 : i32, i32
  }
  func.func @transform_2(%arg0: i32) -> (i32, i32) {
    %c0_i32 = arith.constant 0 : i32
    %c0_i32_0 = arith.constant 0 : i32
    return %arg0, %c0_i32 : i32, i32
  }
}

</mosaic_0001>

<llo_original>
// kernel: tpu_custom_call.1
$region0: #{tpu_custom_call.1}
  #allocation0 [shape = 'u32[]', space=smem, size = 0x4, offset = 0x4, fixed_abs, tag = 'smem constant byte address 0x4 - core index']
  #allocation1 [shape = 'u32[144,128]{1,0:T(1,128)}', space=vmem, size = 0x12000, scoped, tag = 'internal scratch']
  %s0 = inlined_call_operand.hbm [shape: f32[16,32], index: 0, kind: input, shape index: {}]
  %s1 = inlined_call_operand.vmem [shape: f32[1,32], index: 1, kind: input, shape index: {}]
  %s2 = inlined_call_operand.hbm [shape: f32[16,32], index: 2, kind: output, shape index: {}]
  %s3 = sld [smem:[#allocation0]]
  $region22: #{tpu_custom_call.1} parent=0
    _
  %s5 = ssub.s32 1, %s3
  %s6 = scalar_select 0, %s5, %s3
  $region1: #{tpu_custom_call.1} parent=0
    #allocation2 [shape = 'u8[8192]{0}', space=vmem, size = 0x2000, scoped, tag = 'input window, operand 0, single buffered']
    #allocation3 [shape = 's32[1]{0}', space=sflag, size = 0x4, scoped, tag = 'scoped memory for tpu_custom_call.1']
    #allocation4 [shape = 's32[1]{0}', space=sflag, size = 0x4, scoped, tag = 'scoped memory for tpu_custom_call.1']
    #allocation5 [shape = 'u8[8192]{0}', space=vmem, size = 0x2000, scoped, tag = 'output window, operand 0, single buffered']
    %7 = vsyncpa [#allocation3], 0
    %8 = vsyncpa [#allocation4], 0
    // Predicated region
    $region2: #{tpu_custom_call.1} parent=1 // pred_check
      _
    $region3: #{tpu_custom_call.1} parent=1 // pred_check_branch
      %10 = sbr.rel (0) target = $region5
    $region4: #{tpu_custom_call.1} parent=1 // pred_region
      %s12 = ssub.s32 256, 256
      %13 = vsyncadd [#allocation3], %s12
      %s14 = sshll.u32 [#allocation2], 4
      %s15 = int_to_ptr.vmem [resolvable:$true] %s14
      %20 = dma.hbm_to_vmem [thread:$0]  %s0, 256, %s15, [#allocation3], 128, 128, 8
    $region5: #{tpu_custom_call.1} parent=1 // pred_fallthru
      _
    // Predicated region
    $region6: #{tpu_custom_call.1} parent=1 // pred_check
      _
    $region7: #{tpu_custom_call.1} parent=1 // pred_check_branch
      %22 = sbr.rel (0) target = $region9
    $region8: #{tpu_custom_call.1} parent=1 // pred_region
      _
    $region9: #{tpu_custom_call.1} parent=1 // pred_fallthru
      _
    // Predicated region
    $region10: #{tpu_custom_call.1} parent=1 // pred_check
      _
    $region11: #{tpu_custom_call.1} parent=1 // pred_check_branch
      %24 = sbr.rel (0) target = $region13
    $region12: #{tpu_custom_call.1} parent=1 // pred_region
      %25 = dma.done [#allocation3], 256
    $region13: #{tpu_custom_call.1} parent=1 // pred_fallthru
      _
    %v26 = vld [vmem:[#allocation2] sm:$0xff]
    %v27 = vld [vmem:[#allocation2 + $0x8] sm:$0xff]
    %v28 = vmul.f32 %v26, %v26
    %v29 = vmul.f32 %v27, %v27
    %vm30 = vcmask 261120
    %v31 = vsel %vm30, %v28, 0.0
    %32 = vadd.xlane.f32.xlu0 %v31
    %v33 = vpop.xlane.xlu0 %32
    %v34 = vsel %vm30, %v29, 0.0
    %35 = vadd.xlane.f32.xlu0 %v34
    %v36 = vpop.xlane.xlu0 %35
    %v37 = vmul.f32 %v33, 0.03125
    %v38 = vmul.f32 %v36, 0.03125
    %v39 = vadd.f32 %v37, 1e-06
    %v40 = vadd.f32 %v38, 1e-06
    %v41 = vrsqrt.pop %v39
    %v42 = vrsqrt.pop %v40
    %v43 = vld [vmem:[%s1] sm:$0x1]
    %v44 = vmul.f32 %v26, %v41
    %v45 = vmul.f32 %v27, %v42
    %v47 = vlaneseq
    %v48 = vshrl.u32 %v47, 7
    %v49 = vsub.s32 0, %v48
    %v50 = vrot.slane %v43, %v49
    %v52 = vmul.f32 %v44, %v50
    %v53 = vmul.f32 %v45, %v50
    %54 = vst.msk [vmem:[#allocation5] sm:$0xff] %vm30, %v52
    %55 = vst.msk [vmem:[#allocation5 + $0x8] sm:$0xff] %vm30, %v53
    // Predicated region
    $region14: #{tpu_custom_call.1} parent=1 // pred_check
      _
    $region15: #{tpu_custom_call.1} parent=1 // pred_check_branch
      %57 = sbr.rel (0) target = $region17
    $region16: #{tpu_custom_call.1} parent=1 // pred_region
      %s59 = ssub.s32 256, 256
      %60 = vsyncadd [#allocation4], %s59
      %s61 = sshll.u32 [#allocation5], 4
      %s62 = int_to_ptr.vmem [resolvable:$true] %s61
      %67 = dma.vmem_to_hbm [thread:$0]  %s62, 256, %s2, [#allocation4], 128, 128, 8
    $region17: #{tpu_custom_call.1} parent=1 // pred_fallthru
      _
    // Predicated region
    $region18: #{tpu_custom_call.1} parent=1 // pred_check
      _
    $region19: #{tpu_custom_call.1} parent=1 // pred_check_branch
      %69 = sbr.rel (0) target = $region21
    $region20: #{tpu_custom_call.1} parent=1 // pred_region
      %70 = dma.done [#allocation4], 256
    $region21: #{tpu_custom_call.1} parent=1 // pred_fallthru
      _
    %71 = vsyncpa [#allocation3], 1
    %72 = vsyncpa [#allocation4], 1

</llo_original>
